<compile_context>
chip_gen: v6e
topology: v6e:2x2x1
jax: 0.10.0
libtpu: 0.0.40
codegen_flags: <defaults>
</compile_context>

<pallas_src>
import jax
import jax.numpy as jnp
from jax.experimental import pallas as pl
from jax.experimental.pallas import tpu as pltpu

EPS = 1e-5
INV_SQRT2 = 0.7071067811865476


# ----------------------------- Pallas kernels ------------------------------ #
def _mlp_kernel(x_ref, w1_ref, b1_ref, w2_ref, b2_ref, o_ref):
    """Folded BN+conv+GELU+conv+BN on a (channels, pixels) tile."""
    x = x_ref[0]                                                  # (2Cin, TP) bf16
    # conv1 with BN1 folded in:  (Cout, 2Cin) @ (2Cin, TP) -> f32 accumulate
    h = jnp.dot(w1_ref[...], x, preferred_element_type=jnp.float32) + b1_ref[...]
    # GELU (tanh approximation -> EUP; input kept f32 for v5e's f32-only EUP)
    h = jax.nn.gelu(h, approximate=True)
    # conv2 with BN2 folded in
    h = jnp.dot(w2_ref[...], h.astype(jnp.bfloat16),
                preferred_element_type=jnp.float32) + b2_ref[...]
    o_ref[0] = h.astype(o_ref.dtype)                              # (Cout, TP) bf16


def _upsample_kernel(y_ref, aw_ref, ah_ref, o_ref):
    """Separable 2x bilinear upsample: W-axis pass then H-axis pass."""
    y = y_ref[0]                                                  # (Cout, H, W) bf16
    # W-axis: t[c, h, v] = sum_w y[c, h, w] * Aw[v, w]
    t = jnp.einsum("chw,cvw->chv", y, aw_ref[...],
                   preferred_element_type=jnp.float32)            # (Cout, H, 2W) f32
    # H-axis: out[c, u, v] = sum_h Ah[u, h] * t[c, h, v]
    out = jnp.einsum("cuh,chv->cuv", ah_ref[...], t.astype(jnp.bfloat16),
                     preferred_element_type=jnp.float32)          # (Cout, 2H, 2W) f32
    o_ref[0] = out


# ------------------------------ JAX glue ----------------------------------- #
def _interp_matrix(n_in, n_out):
    """Bilinear interpolation matrix (align_corners=True), shape (n_out, n_in)."""
    i = jnp.arange(n_out, dtype=jnp.float32)
    src = i * (n_in - 1) / (n_out - 1)
    k0 = jnp.clip(jnp.floor(src).astype(jnp.int32), 0, n_in - 1)
    k1 = jnp.clip(k0 + 1, 0, n_in - 1)
    frac = src - k0.astype(jnp.float32)
    a = jnp.zeros((n_out, n_in), jnp.float32)
    a = a.at[jnp.arange(n_out), k0].add(1.0 - frac)
    a = a.at[jnp.arange(n_out), k1].add(frac)
    return a


def init_params(key, cin, cout):
    c2 = 2 * cin
    ks = jax.random.split(key, 12)
    return dict(
        g1=1.0 + 0.1 * jax.random.normal(ks[0], (c2,), jnp.float32),
        be1=0.1 * jax.random.normal(ks[1], (c2,), jnp.float32),
        m1=0.1 * jax.random.normal(ks[2], (c2,), jnp.float32),
        v1=jax.random.uniform(ks[3], (c2,), jnp.float32, minval=0.5, maxval=1.5),
        w1=0.2 * jax.random.normal(ks[4], (cout, c2), jnp.float32),
        b1=0.1 * jax.random.normal(ks[5], (cout,), jnp.float32),
        w2=0.2 * jax.random.normal(ks[6], (cout, cout), jnp.float32),
        b2=0.1 * jax.random.normal(ks[7], (cout,), jnp.float32),
        g2=1.0 + 0.1 * jax.random.normal(ks[8], (cout,), jnp.float32),
        be2=0.1 * jax.random.normal(ks[9], (cout,), jnp.float32),
        m2=0.1 * jax.random.normal(ks[10], (cout,), jnp.float32),
        v2=jax.random.uniform(ks[11], (cout,), jnp.float32, minval=0.5, maxval=1.5),
    )


def epfm_forward(x_nchw, params):
    """EPFM forward. x_nchw: (N, Cin, H, W) f32 -> (N, Cout, 2H, 2W) f32."""
    N, cin, H, W = x_nchw.shape
    c2 = 2 * cin
    cout = params["w1"].shape[0]
    hw = H * W

    # TODO(synk): EDB / HPB submodule definitions are not provided in the
    # source; they are modeled here as identity feature branches (each -> x).
    x_cat = jnp.concatenate([x_nchw, x_nchw], axis=1)             # (N, 2Cin, H, W)

    # Fold BN running stats into the 1x1 convs (inference semantics):
    #   conv1(BN1(x)) = (W1*s1) @ x + (W1 @ t1 + b1)
    #   BN2(conv2(y)) = (s2*W2) @ y + (s2*b2 + t2)
    s1 = params["g1"] / jnp.sqrt(params["v1"] + EPS)
    t1 = params["be1"] - params["m1"] * s1
    s2 = params["g2"] / jnp.sqrt(params["v2"] + EPS)
    t2 = params["be2"] - params["m2"] * s2
    w1f = (params["w1"] * s1[None, :]).astype(jnp.bfloat16)       # (Cout, 2Cin)
    b1f = (params["w1"] @ t1 + params["b1"]).reshape(cout, 1)     # f32
    w2f = (params["w2"] * s2[:, None]).astype(jnp.bfloat16)       # (Cout, Cout)
    b2f = (s2 * params["b2"] + t2).reshape(cout, 1)               # f32

    # channels-on-sublane / pixels-on-lane, bf16 (halves activation DMA bytes)
    x_flat = x_cat.reshape(N, c2, hw).astype(jnp.bfloat16)        # (N, 2Cin, HW)

    # Pixel tiling: whole image per step for small HW, 4096-pixel chunks else.
    tp = hw if hw <= 4096 else 4096
    assert hw % tp == 0, "HW must be a multiple of the pixel tile"

    # ---- Kernel 1: folded BN/conv/GELU MLP ---------------------------------
    y = pl.pallas_call(
        _mlp_kernel,
        out_shape=jax.ShapeDtypeStruct((N, cout, hw), jnp.bfloat16),
        grid_spec=pltpu.PrefetchScalarGridSpec(
            num_scalar_prefetch=0,
            grid=(N, hw // tp),
            in_specs=[
                pl.BlockSpec((1, c2, tp), lambda n, p: (n, 0, p)),
                pl.BlockSpec((cout, c2), lambda n, p: (0, 0)),
                pl.BlockSpec((cout, 1), lambda n, p: (0, 0)),
                pl.BlockSpec((cout, cout), lambda n, p: (0, 0)),
                pl.BlockSpec((cout, 1), lambda n, p: (0, 0)),
            ],
            out_specs=pl.BlockSpec((1, cout, tp), lambda n, p: (n, 0, p)),
        ),
        compiler_params=pltpu.CompilerParams(
            dimension_semantics=("parallel", "parallel"),
            vmem_limit_bytes=32 * 1024 * 1024),
    )(x_flat, w1f, b1f, w2f, b2f)

    # ---- Kernel 2: separable bilinear 2x upsample --------------------------
    ah = _interp_matrix(H, 2 * H)                                  # (2H, H)
    aw = _interp_matrix(W, 2 * W)                                  # (2W, W)
    # Pre-broadcast across the channel batch dim so the kernel does pure
    # batched matmuls (no in-kernel broadcast/reshape); tiny constant arrays.
    awb = jnp.broadcast_to(aw[None], (cout, 2 * W, W)).astype(jnp.bfloat16)
    ahb = jnp.broadcast_to(ah[None], (cout, 2 * H, H)).astype(jnp.bfloat16)

    y4 = y.reshape(N, cout, H, W)          # free (row-major) metadata reshape

    out = pl.pallas_call(
        _upsample_kernel,
        out_shape=jax.ShapeDtypeStruct((N, cout, 2 * H, 2 * W), jnp.float32),
        grid_spec=pltpu.PrefetchScalarGridSpec(
            num_scalar_prefetch=0,
            grid=(N,),
            in_specs=[
                pl.BlockSpec((1, cout, H, W), lambda n: (n, 0, 0, 0)),
                pl.BlockSpec((cout, 2 * W, W), lambda n: (0, 0, 0)),
                pl.BlockSpec((cout, 2 * H, H), lambda n: (0, 0, 0)),
            ],
            out_specs=pl.BlockSpec((1, cout, 2 * H, 2 * W),
                                   lambda n: (n, 0, 0, 0)),
        ),
        compiler_params=pltpu.CompilerParams(
            dimension_semantics=("parallel",),
            vmem_limit_bytes=32 * 1024 * 1024),
    )(y4, awb, ahb)

    return out                                                    # NCHW already


# Pure-JAX f32 reference (PyTorch semantics: exact erf GELU) for correctness.
def reference_forward(x, params):
    N, cin, H, W = x.shape
    x_cat = jnp.concatenate([x, x], axis=1)
    s1 = params["g1"] / jnp.sqrt(params["v1"] + EPS)
    t1 = params["be1"] - params["m1"] * s1
    h = x_cat * s1[None, :, None, None] + t1[None, :, None, None]
    h = jnp.einsum("nchw,oc->nohw", h, params["w1"]) + params["b1"][None, :, None, None]
    h = 0.5 * h * (1.0 + jax.lax.erf(h * INV_SQRT2))
    h = jnp.einsum("nchw,oc->nohw", h, params["w2"]) + params["b2"][None, :, None, None]
    s2 = params["g2"] / jnp.sqrt(params["v2"] + EPS)
    t2 = params["be2"] - params["m2"] * s2
    h = h * s2[None, :, None, None] + t2[None, :, None, None]
    ah = _interp_matrix(H, 2 * H)
    aw = _interp_matrix(W, 2 * W)
    return jnp.einsum("ik,jl,nckl->ncij", ah, aw, h)


if __name__ == "__main__":
    key = jax.random.PRNGKey(0)
    kx, kp = jax.random.split(key)

    N, Cin, H, W = 2, 4, 16, 16
    Cout = 8

    x = jax.random.normal(kx, (N, Cin, H, W), dtype=jnp.float32)
    params = init_params(kp, Cin, Cout)

    out = jax.block_until_ready(epfm_forward(x, params))
    ref = reference_forward(x, params)

    assert out.shape == (N, Cout, 2 * H, 2 * W), out.shape
    # Tolerance covers bf16 MXU operands + tanh-approx GELU vs f32/erf reference.
    err = float(jnp.max(jnp.abs(out - ref)))
    if not err < 8e-2:
        raise AssertionError(f"Pallas kernel output mismatches reference (max abs err {err})")
    print("KERNEL_OK")
</pallas_src>

<mosaic_0001>
module attributes {stable_mosaic.version = 11 : i64} {
  func.func @_mlp_kernel(%arg0: i32, %arg1: i32, %arg2: memref<1x8x256xbf16, #tpu.memory_space<vmem>>, %arg3: memref<8x8xbf16, #tpu.memory_space<vmem>>, %arg4: memref<8x1xf32, #tpu.memory_space<vmem>>, %arg5: memref<8x8xbf16, #tpu.memory_space<vmem>>, %arg6: memref<8x1xf32, #tpu.memory_space<vmem>>, %arg7: memref<1x8x256xbf16, #tpu.memory_space<vmem>>) attributes {dimension_semantics = [#tpu.dimension_semantics<parallel>, #tpu.dimension_semantics<parallel>], iteration_bounds = array<i64: 2, 1>, scalar_prefetch = 0 : i64, scratch_operands = 0 : i64, tpu.core_type = #tpu.core_type<tc>, window_params = [{transform_indices = @transform_0, window_bounds = array<i64: 1, 8, 256>}, {pipeline_mode = #tpu.pipeline_mode<synchronous>, transform_indices = @transform_1, window_bounds = array<i64: 8, 8>}, {pipeline_mode = #tpu.pipeline_mode<synchronous>, transform_indices = @transform_2, window_bounds = array<i64: 8, 1>}, {pipeline_mode = #tpu.pipeline_mode<synchronous>, transform_indices = @transform_3, window_bounds = array<i64: 8, 8>}, {pipeline_mode = #tpu.pipeline_mode<synchronous>, transform_indices = @transform_4, window_bounds = array<i64: 8, 1>}, {transform_indices = @transform_5, window_bounds = array<i64: 1, 8, 256>}]} {
    %c0 = arith.constant 0 : index
    %c0_0 = arith.constant 0 : index
    %c0_1 = arith.constant 0 : index
    %0 = vector.load %arg2[%c0, %c0_0, %c0_1] : memref<1x8x256xbf16, #tpu.memory_space<vmem>>, vector<1x8x256xbf16>
    %1 = vector.shape_cast %0 : vector<1x8x256xbf16> to vector<8x256xbf16>
    %c0_2 = arith.constant 0 : index
    %c0_3 = arith.constant 0 : index
    %2 = vector.load %arg3[%c0_2, %c0_3] : memref<8x8xbf16, #tpu.memory_space<vmem>>, vector<8x8xbf16>
    %cst = arith.constant dense<0.000000e+00> : vector<8x256xf32>
    %3 = tpu.matmul %2, %1, %cst {dimension_numbers = #tpu.dot_dimension_numbers<[1], [0], [0], [1], [0, 0, 1, 1], [], []>} : vector<8x8xbf16>, vector<8x256xbf16>, vector<8x256xf32> -> vector<8x256xf32>
    %c0_4 = arith.constant 0 : index
    %c0_5 = arith.constant 0 : index
    %4 = vector.load %arg4[%c0_4, %c0_5] : memref<8x1xf32, #tpu.memory_space<vmem>>, vector<8x1xf32>
    %5 = vector.broadcast %4 : vector<8x1xf32> to vector<8x256xf32>
    %6 = arith.addf %3, %5 : vector<8x256xf32>
    %7 = arith.mulf %6, %6 : vector<8x256xf32>
    %8 = arith.mulf %6, %7 : vector<8x256xf32>
    %cst_6 = arith.constant 4.471500e-02 : f32
    %9 = vector.broadcast %cst_6 : f32 to vector<8x256xf32>
    %10 = arith.mulf %9, %8 : vector<8x256xf32>
    %11 = arith.addf %6, %10 : vector<8x256xf32>
    %cst_7 = arith.constant 0.797884583 : f32
    %12 = vector.broadcast %cst_7 : f32 to vector<8x256xf32>
    %13 = arith.mulf %12, %11 : vector<8x256xf32>
    %14 = math.tanh %13 : vector<8x256xf32>
    %cst_8 = arith.constant 1.000000e+00 : f32
    %15 = vector.broadcast %cst_8 : f32 to vector<8x256xf32>
    %16 = arith.addf %15, %14 : vector<8x256xf32>
    %cst_9 = arith.constant 5.000000e-01 : f32
    %17 = vector.broadcast %cst_9 : f32 to vector<8x256xf32>
    %18 = arith.mulf %17, %16 : vector<8x256xf32>
    %19 = arith.mulf %6, %18 : vector<8x256xf32>
    %c0_10 = arith.constant 0 : index
    %c0_11 = arith.constant 0 : index
    %20 = vector.load %arg5[%c0_10, %c0_11] : memref<8x8xbf16, #tpu.memory_space<vmem>>, vector<8x8xbf16>
    %21 = arith.truncf %19 : vector<8x256xf32> to vector<8x256xbf16>
    %cst_12 = arith.constant dense<0.000000e+00> : vector<8x256xf32>
    %22 = tpu.matmul %20, %21, %cst_12 {dimension_numbers = #tpu.dot_dimension_numbers<[1], [0], [0], [1], [0, 0, 1, 1], [], []>} : vector<8x8xbf16>, vector<8x256xbf16>, vector<8x256xf32> -> vector<8x256xf32>
    %c0_13 = arith.constant 0 : index
    %c0_14 = arith.constant 0 : index
    %23 = vector.load %arg6[%c0_13, %c0_14] : memref<8x1xf32, #tpu.memory_space<vmem>>, vector<8x1xf32>
    %24 = vector.broadcast %23 : vector<8x1xf32> to vector<8x256xf32>
    %25 = arith.addf %22, %24 : vector<8x256xf32>
    %26 = arith.truncf %25 : vector<8x256xf32> to vector<8x256xbf16>
    %c0_15 = arith.constant 0 : index
    %c0_16 = arith.constant 0 : index
    %c0_17 = arith.constant 0 : index
    %27 = vector.load %arg7[%c0_15, %c0_16, %c0_17] : memref<1x8x256xbf16, #tpu.memory_space<vmem>>, vector<1x8x256xbf16>
    %28 = vector.shape_cast %27 : vector<1x8x256xbf16> to vector<8x256xbf16>
    %29 = vector.shape_cast %26 : vector<8x256xbf16> to vector<1x8x256xbf16>
    tpu.vector_store %arg7[%c0_15, %c0_16, %c0_17], %29 {strides = array<i32>} : memref<1x8x256xbf16, #tpu.memory_space<vmem>>, vector<1x8x256xbf16>,
    return
  }
  func.func @transform_0(%arg0: i32, %arg1: i32) -> (i32, i32, i32) {
    %c0_i32 = arith.constant 0 : i32
    %c0_i32_0 = arith.constant 0 : i32
    return %arg0, %c0_i32, %arg1 : i32, i32, i32
  }
  func.func @transform_1(%arg0: i32, %arg1: i32) -> (i32, i32) {
    %c0_i32 = arith.constant 0 : i32
    %c0_i32_0 = arith.constant 0 : i32
    %c0_i32_1 = arith.constant 0 : i32
    return %c0_i32, %c0_i32_0 : i32, i32
  }
  func.func @transform_2(%arg0: i32, %arg1: i32) -> (i32, i32) {
    %c0_i32 = arith.constant 0 : i32
    %c0_i32_0 = arith.constant 0 : i32
    %c0_i32_1 = arith.constant 0 : i32
    return %c0_i32, %c0_i32_0 : i32, i32
  }
  func.func @transform_3(%arg0: i32, %arg1: i32) -> (i32, i32) {
    %c0_i32 = arith.constant 0 : i32
    %c0_i32_0 = arith.constant 0 : i32
    %c0_i32_1 = arith.constant 0 : i32
    return %c0_i32, %c0_i32_0 : i32, i32
  }
  func.func @transform_4(%arg0: i32, %arg1: i32) -> (i32, i32) {
    %c0_i32 = arith.constant 0 : i32
    %c0_i32_0 = arith.constant 0 : i32
    %c0_i32_1 = arith.constant 0 : i32
    return %c0_i32, %c0_i32_0 : i32, i32
  }
  func.func @transform_5(%arg0: i32, %arg1: i32) -> (i32, i32, i32) {
    %c0_i32 = arith.constant 0 : i32
    %c0_i32_0 = arith.constant 0 : i32
    return %arg0, %c0_i32, %arg1 : i32, i32, i32
  }
}

</mosaic_0001>

<llo_original>
// kernel: tpu_custom_call.1
$region0: #{tpu_custom_call.1}
  #allocation0 [shape = 'u32[]', space=smem, size = 0x4, offset = 0x4, fixed_abs, tag = 'smem constant byte address 0x4 - core index']
  #allocation1 [shape = 'u32[144,128]{1,0:T(1,128)}', space=vmem, size = 0x12000, scoped, tag = 'internal scratch']
  %s0 = inlined_call_operand.vmem [shape: bf16[2,8,256], index: 0, kind: input, shape index: {}]
  %s1 = inlined_call_operand.hbm [shape: bf16[8,8], index: 1, kind: input, shape index: {}]
  %s2 = inlined_call_operand.vmem [shape: f32[8,1], index: 2, kind: input, shape index: {}]
  %s3 = inlined_call_operand.vmem [shape: bf16[8,8], index: 3, kind: input, shape index: {}]
  %s4 = inlined_call_operand.vmem [shape: f32[8,1], index: 4, kind: input, shape index: {}]
  %s5 = inlined_call_operand.hbm [shape: bf16[2,8,256], index: 5, kind: output, shape index: {}]
  %s6 = sld [smem:[#allocation0]]
  $region57: #{tpu_custom_call.1} parent=0
    _
  %s8 = ssub.s32 1, %s6
  %s9 = scalar_select 0, %s8, %s6
  $region1: #{tpu_custom_call.1} parent=0
    #allocation2 [shape = 'u8[2048]{0}', space=vmem, size = 0x800, scoped, tag = 'input window, operand 1, single buffered']
    #allocation3 [shape = 's32[2]{0}', space=sflag, size = 0x8, scoped, tag = 'scoped memory for tpu_custom_call.1']
    #allocation4 [shape = 's32[2]{0}', space=sflag, size = 0x8, scoped, tag = 'scoped memory for tpu_custom_call.1']
    #allocation5 [shape = 'u8[8192]{0}', space=vmem, size = 0x2000, scoped, tag = 'output window, operand 0']
    %10 = vsyncpa [#allocation3], 0
    %11 = vsyncpa [#allocation4], 0
    %s12 = scalar_lea.sflag [#allocation4], 1
    %13 = vsyncpa %s12, 0
    loop: start=0, step=1, limit=4
    $region2: #{tpu_custom_call.1} parent=1 // loop_pre_header
      _
    $region3: #{tpu_custom_call.1} parent=1 // loop_header
      %s15 = sphi 0, %s19
      %p16 = scmp.ge.s32.totalorder %s15, 4
      %s22 = sphi 0, %s34
      %s23 = sphi 0, %s30
      %s24 = sphi 0, %s22
      %s25 = sphi 0, %s23
      %s26 = sphi 0, %s24
      %s27 = sphi 0, %s25
      %s39 = sphi 0, %s41
      %s42 = sphi 0, %s39
      %s43 = sphi 0, %s42
      %s59 = sphi 0, %s43
      %s63 = sphi 0, %s63
      %s65 = sphi 0, %s63
      %s66 = sphi 0, %s65
      %s80 = sphi 0, %s66
      %s84 = sphi 0, %s84
      %s86 = sphi 0, %s84
      %s87 = sphi 0, %s86
      %s101 = sphi 0, %s87
      %s105 = sphi 0, %s105
      %s107 = sphi 0, %s105
      %s108 = sphi 0, %s107
      %s122 = sphi 0, %s108
      %s126 = sphi 0, %s126
      %s128 = sphi 0, %s126
      %s129 = sphi 0, %s128
      %s143 = sphi 0, %s129
      %s151 = sphi 0, %s153
      %s154 = sphi 0, %s151
      %s155 = sphi 0, %s154
      %s171 = sphi 0, %s155
    $region4: #{tpu_custom_call.1} parent=1 // loop_header_branch
      %18 = sbr.rel (%p16) target = $region8
    $region5: #{tpu_custom_call.1} parent=1 // loop_body
      %s20 = ssub.s32 %s15, 1
      %s21 = ssub.s32 %s15, 2
      %s28 = sadd.s32 1, %s23
      %p29 = scmp.ge.s32.totalorder %s28, 1
      %s30 = scalar_select %p29, 0, %s28
      %s31 = sadd.s32 1, %s22
      %s32 = scalar_select %p29, %s31, %s22
      %p33 = scmp.ge.s32.totalorder %s32, 2
      %s34 = scalar_select %p33, 0, %s32
      %s35 = ssub.s32 %s22, %s34
      %s36 = ssub.s32 %s23, %s30
      %s37 = sor.u32 %s35, %s36
      %p38 = scmp.eq.s32.totalorder %s37, 0
      %s40 = sadd.s32 %s39, 1
      %s41 = scalar_select %p38, %s39, %s40
      %p44 = pneg %p38
      %p45 = scmp.eq.s32.totalorder %s15, 1
      %p46 = por %p44, %p45
      %p47 = scmp.ne.s32.totalorder %s39, %s42
      %p48 = scmp.eq.s32.totalorder %s15, 0
      %p49 = por %p47, %p48
      %p50 = scmp.ne.s32.totalorder %s39, %s42
      %p51 = scmp.eq.s32.totalorder %s20, 1
      %p52 = por %p50, %p51
      %p53 = scmp.ne.s32.totalorder %s42, %s43
      %p54 = scmp.eq.s32.totalorder %s20, 0
      %p55 = por %p53, %p54
      %p56 = scmp.ne.s32.totalorder %s42, %s43
      %p57 = scmp.eq.s32.totalorder %s21, 1
      %p58 = por %p56, %p57
      %p60 = scmp.ne.s32.totalorder %s43, %s59
      %p61 = scmp.eq.s32.totalorder %s21, 0
      %p62 = por %p60, %p61
      %s64 = sadd.s32 %s63, 1
      %p67 = scmp.eq.s32.totalorder %s15, 1
      %p68 = scmp.ne.s32.totalorder %s63, %s65
      %p69 = scmp.eq.s32.totalorder %s15, 0
      %p70 = por %p68, %p69
      %p71 = scmp.ne.s32.totalorder %s63, %s65
      %p72 = scmp.eq.s32.totalorder %s20, 1
      %p73 = por %p71, %p72
      %p74 = scmp.ne.s32.totalorder %s65, %s66
      %p75 = scmp.eq.s32.totalorder %s20, 0
      %p76 = por %p74, %p75
      %p77 = scmp.ne.s32.totalorder %s65, %s66
      %p78 = scmp.eq.s32.totalorder %s21, 1
      %p79 = por %p77, %p78
      %p81 = scmp.ne.s32.totalorder %s66, %s80
      %p82 = scmp.eq.s32.totalorder %s21, 0
      %p83 = por %p81, %p82
      %s85 = sadd.s32 %s84, 1
      %p88 = scmp.eq.s32.totalorder %s15, 1
      %p89 = scmp.ne.s32.totalorder %s84, %s86
      %p90 = scmp.eq.s32.totalorder %s15, 0
      %p91 = por %p89, %p90
      %p92 = scmp.ne.s32.totalorder %s84, %s86
      %p93 = scmp.eq.s32.totalorder %s20, 1
      %p94 = por %p92, %p93
      %p95 = scmp.ne.s32.totalorder %s86, %s87
      %p96 = scmp.eq.s32.totalorder %s20, 0
      %p97 = por %p95, %p96
      %p98 = scmp.ne.s32.totalorder %s86, %s87
      %p99 = scmp.eq.s32.totalorder %s21, 1
      %p100 = por %p98, %p99
      %p102 = scmp.ne.s32.totalorder %s87, %s101
      %p103 = scmp.eq.s32.totalorder %s21, 0
      %p104 = por %p102, %p103
      %s106 = sadd.s32 %s105, 1
      %p109 = scmp.eq.s32.totalorder %s15, 1
      %p110 = scmp.ne.s32.totalorder %s105, %s107
      %p111 = scmp.eq.s32.totalorder %s15, 0
      %p112 = por %p110, %p111
      %p113 = scmp.ne.s32.totalorder %s105, %s107
      %p114 = scmp.eq.s32.totalorder %s20, 1
      %p115 = por %p113, %p114
      %p116 = scmp.ne.s32.totalorder %s107, %s108
      %p117 = scmp.eq.s32.totalorder %s20, 0
      %p118 = por %p116, %p117
      %p119 = scmp.ne.s32.totalorder %s107, %s108
      %p120 = scmp.eq.s32.totalorder %s21, 1
      %p121 = por %p119, %p120
      %p123 = scmp.ne.s32.totalorder %s108, %s122
      %p124 = scmp.eq.s32.totalorder %s21, 0
      %p125 = por %p123, %p124
      %s127 = sadd.s32 %s126, 1
      %p130 = scmp.eq.s32.totalorder %s15, 1
      %p131 = scmp.ne.s32.totalorder %s126, %s128
      %p132 = scmp.eq.s32.totalorder %s15, 0
      %p133 = por %p131, %p132
      %p134 = scmp.ne.s32.totalorder %s126, %s128
      %p135 = scmp.eq.s32.totalorder %s20, 1
      %p136 = por %p134, %p135
      %p137 = scmp.ne.s32.totalorder %s128, %s129
      %p138 = scmp.eq.s32.totalorder %s20, 0
      %p139 = por %p137, %p138
      %p140 = scmp.ne.s32.totalorder %s128, %s129
      %p141 = scmp.eq.s32.totalorder %s21, 1
      %p142 = por %p140, %p141
      %p144 = scmp.ne.s32.totalorder %s129, %s143
      %p145 = scmp.eq.s32.totalorder %s21, 0
      %p146 = por %p144, %p145
      %s147 = ssub.s32 %s22, %s34
      %s148 = ssub.s32 %s23, %s30
      %s149 = sor.u32 %s147, %s148
      %p150 = scmp.eq.s32.totalorder %s149, 0
      %s152 = sadd.s32 %s151, 1
      %s153 = scalar_select %p150, %s151, %s152
      %p156 = pneg %p150
      %p157 = scmp.eq.s32.totalorder %s15, 1
      %p158 = por %p156, %p157
      %p159 = scmp.ne.s32.totalorder %s151, %s154
      %p160 = scmp.eq.s32.totalorder %s15, 0
      %p161 = por %p159, %p160
      %p162 = scmp.ne.s32.totalorder %s151, %s154
      %p163 = scmp.eq.s32.totalorder %s20, 1
      %p164 = por %p162, %p163
      %p165 = scmp.ne.s32.totalorder %s154, %s155
      %p166 = scmp.eq.s32.totalorder %s20, 0
      %p167 = por %p165, %p166
      %p168 = scmp.ne.s32.totalorder %s154, %s155
      %p169 = scmp.eq.s32.totalorder %s21, 1
      %p170 = por %p168, %p169
      %p172 = scmp.ne.s32.totalorder %s155, %s171
      %p173 = scmp.eq.s32.totalorder %s21, 0
      %p174 = por %p172, %p173
      %p175 = scmp.le.s32.totalorder 1, %s15
      %p176 = scmp.lt.s32.totalorder %s15, 3
      %p177 = pnand %p175, %p176
      %p178 = pneg %p177
      // Predicated region
      $region9: #{tpu_custom_call.1} parent=5 // pred_check
        _
      $region10: #{tpu_custom_call.1} parent=5 // pred_check_branch
        %180 = sbr.rel (%p177) target = $region12
      $region11: #{tpu_custom_call.1} parent=5 // pred_region
        %s181 = ssub.s32 %s15, 1
        // Predicated region
        $region13: #{tpu_custom_call.1} parent=11 // pred_check
          %p182 = pneg %p76
        $region14: #{tpu_custom_call.1} parent=11 // pred_check_branch
          %184 = sbr.rel (%p182) target = $region16
        $region15: #{tpu_custom_call.1} parent=11 // pred_region
          %s186 = ssub.s32 64, 64
          %187 = vsyncadd [#allocation3], %s186
          %s189 = sshll.u32 [#allocation2], 4
          %s190 = int_to_ptr.vmem [resolvable:$true] %s189
          %192 = dma.hbm_to_vmem [thread:$0]  %s1, 64, %s190, [#allocation3]
        $region16: #{tpu_custom_call.1} parent=11 // pred_fallthru
          _
        // Predicated region
        $region17: #{tpu_custom_call.1} parent=11 // pred_check
          %p193 = pneg %p97
        $region18: #{tpu_custom_call.1} parent=11 // pred_check_branch
          %195 = sbr.rel (%p193) target = $region20
        $region19: #{tpu_custom_call.1} parent=11 // pred_region
          _
        $region20: #{tpu_custom_call.1} parent=11 // pred_fallthru
          _
        // Predicated region
        $region21: #{tpu_custom_call.1} parent=11 // pred_check
          %p196 = pneg %p118
        $region22: #{tpu_custom_call.1} parent=11 // pred_check_branch
          %198 = sbr.rel (%p196) target = $region24
        $region23: #{tpu_custom_call.1} parent=11 // pred_region
          _
        $region24: #{tpu_custom_call.1} parent=11 // pred_fallthru
          _
        // Predicated region
        $region25: #{tpu_custom_call.1} parent=11 // pred_check
          %p199 = pneg %p139
        $region26: #{tpu_custom_call.1} parent=11 // pred_check_branch
          %201 = sbr.rel (%p199) target = $region28
        $region27: #{tpu_custom_call.1} parent=11 // pred_region
          _
        $region28: #{tpu_custom_call.1} parent=11 // pred_fallthru
          _
      $region12: #{tpu_custom_call.1} parent=5 // pred_fallthru
        _
      %p202 = scmp.lt.s32.totalorder %s15, 2
      // Predicated region
      $region29: #{tpu_custom_call.1} parent=5 // pred_check
        %p203 = pneg %p202
      $region30: #{tpu_custom_call.1} parent=5 // pred_check_branch
        %205 = sbr.rel (%p203) target = $region32
      $region31: #{tpu_custom_call.1} parent=5 // pred_region
        // Predicated region
        $region33: #{tpu_custom_call.1} parent=31 // pred_check
          %p206 = pneg %p49
        $region34: #{tpu_custom_call.1} parent=31 // pred_check_branch
          %208 = sbr.rel (%p206) target = $region36
        $region35: #{tpu_custom_call.1} parent=31 // pred_region
          %s209 = smul.u32 2, %s23
          %p210 = scmp.lt.s32.totalorder %s22, 1
          %s211 = scalar_select %p210, %s22, 1
          %p212 = scmp.lt.s32.totalorder %s209, 1
          %s213 = scalar_select %p212, %s209, 1
          %s214 = smul.addr %s211, 2
          %s215 = sadd.s32 %s213, %s214
          %s216 = smul.addr %s215, 4
          %s217 = scalar_lea.vmem %s0, %s216
          %s218 = smul.u32 2, %s23
        $region36: #{tpu_custom_call.1} parent=31 // pred_fallthru
          _
      $region32: #{tpu_custom_call.1} parent=5 // pred_fallthru
        _
      %p219 = scmp.le.s32.totalorder 1, %s15
      %p220 = scmp.lt.s32.totalorder %s15, 3
      %p221 = pnand %p219, %p220
      %p222 = pneg %p221
      // Predicated region
      $region37: #{tpu_custom_call.1} parent=5 // pred_check
        _
      $region38: #{tpu_custom_call.1} parent=5 // pred_check_branch
        %224 = sbr.rel (%p221) target = $region40
      $region39: #{tpu_custom_call.1} parent=5 // pred_region
        %s225 = ssub.s32 %s15, 1
        // Predicated region
        $region41: #{tpu_custom_call.1} parent=39 // pred_check
          %p226 = pneg %p76
        $region42: #{tpu_custom_call.1} parent=39 // pred_check_branch
          %228 = sbr.rel (%p226) target = $region44
        $region43: #{tpu_custom_call.1} parent=39 // pred_region
          %229 = dma.done [#allocation3], 64
        $region44: #{tpu_custom_call.1} parent=39 // pred_fallthru
          _
        %s230 = smul.u32 2, %s25
        %p231 = scmp.lt.s32.totalorder %s24, 1
        %s232 = scalar_select %p231, %s24, 1
        %p233 = scmp.lt.s32.totalorder %s230, 1
        %s234 = scalar_select %p233, %s230, 1
        %s235 = smul.addr %s232, 2
        %s236 = sadd.s32 %s234, %s235
        %s237 = smul.addr %s236, 4
        %s238 = scalar_lea.vmem %s0, %s237
        %p239 = pneg %p55
        %p240 = pneg %p52
        %p241 = pneg %p76
        %p242 = pneg %p73
        %p243 = pneg %p97
        %p244 = pneg %p94
        %p245 = pneg %p118
        %p246 = pneg %p115
        %p247 = pneg %p139
        %p248 = pneg %p136
        %p249 = pneg %p167
        %p250 = pneg %p164
        %s251 = sand.u32 %s154, 1
        %s252 = scalar_lea.sflag [#allocation4], %s251
        %s253 = sand.u32 %s154, 1
        %s254 = smul.addr %s253, 8
        %s255 = scalar_lea.vmem [#allocation5], %s254
        %s256 = smul.u32 2, %s25
        %p257 = scmp.lt.s32.totalorder %s24, 1
        %s258 = scalar_select %p257, %s24, 1
        %p259 = scmp.lt.s32.totalorder %s256, 1
        %s260 = scalar_select %p259, %s256, 1
        %s261 = smul.addr %s258, 2
        %s262 = sadd.s32 %s260, %s261
        %s263 = smul.addr %s262, 4
        %s264 = scalar_lea.vmem %s0, %s263
        %s265 = smul.u32 2, %s25
        %s266 = smul.u32 2, %s25
        %v268 = vld [vmem:[%s264] sm:$0xff]
        %v269 = vld [vmem:[#allocation2] sm:$0xf]
        %v270 = vld [vmem:[%s2] sm:$0xff]
        %272 = vset.pattern.permute.xlu0 0
        %273 = vperm.xlu0 %272, %v270
        %v274 = vpop.permute.xlu0 %273
        %v277 = vunpack.c.l.b16 %v268
        %v278 = vunpack.c.h.b16 %v268
        %v279 = vpack.c.b16 %v277, %v277
        %v280 = vpack.c.b16 %v278, %v278
        %vm281 = vcmask 64512
        %v283 = vsel %vm281, %v269, 0
        %vm285 = vcmask 1043456
        %v287 = vsel %vm285, %v279, 0
        %v290 = vsel %vm285, %v280, 0
        %292 = vmatprep.subr.bf16.mxu0 0
        %293 = vmatpush1.bf16.msra.mxu0 0
        %294 = vmatprep.subr.bf16.mxu0 0
        %295 = vmatpush1.bf16.msra.mxu0 0
        %296 = vmatprep.subr.bf16.mxu0 0
        %297 = vmatpush1.bf16.msra.mxu0 0
        %298 = vmatprep.subr.bf16.mxu0 0
        %299 = vmatpush1.bf16.msra.mxu0 0
        %300 = vmatprep.subr.bf16.mxu0 0
        %301 = vmatpush1.bf16.msra.mxu0 0
        %302 = vmatprep.subr.bf16.mxu0 0
        %303 = vmatpush1.bf16.msra.mxu0 0
        %304 = vmatprep.subr.bf16.mxu0 0
        %305 = vmatpush1.bf16.msra.mxu0 0
        %306 = vmatprep.subr.bf16.mxu0 %v290
        %307 = vmatpush1.bf16.msra.mxu0 %v287
        %308 = vmatprep.subr.bf16.mxu0 0
        %309 = vmatpush2.bf16.msra.mxu0 0
        %310 = vmatprep.subr.bf16.mxu0 0
        %311 = vmatpush2.bf16.msra.mxu0 0
        %312 = vmatprep.subr.bf16.mxu0 0
        %313 = vmatpush2.bf16.msra.mxu0 0
        %314 = vmatprep.subr.bf16.mxu0 0
        %315 = vmatpush2.bf16.msra.mxu0 0
        %316 = vmatprep.subr.bf16.mxu0 0
        %317 = vmatpush2.bf16.msra.mxu0 0
        %318 = vmatprep.subr.bf16.mxu0 0
        %319 = vmatpush2.bf16.msra.mxu0 0
        %320 = vmatprep.subr.bf16.mxu0 0
        %321 = vmatpush2.bf16.msra.mxu0 0
        %322 = vmatprep.subr.bf16.mxu0 0
        %323 = vmatpush2.bf16.msra.mxu0 0
        %324 = vmatprep.mubr.bf16.mxu0 0
        %325 = vmatmul.mubr.bf16.gmra.mxu0 %v283
        %v326 = vpop.f32.mrf.mxu0
        %v327 = vadd.f32 %v274, %v326
        %v328 = vpop.f32.mrf.mxu0
        %v329 = vadd.f32 %v274, %v328
        %v330 = vpop.f32.mrf.mxu0
        %v331 = vpop.f32.mrf.mxu0
        %332 = vdwg.mxu0
        %v333 = vmul.f32 %v327, %v327
        %v334 = vmul.f32 %v329, %v329
        %v335 = vmul.f32 %v327, %v333
        %v336 = vmul.f32 %v329, %v334
        %v337 = vmul.f32 %v335, 0.044715
        %v338 = vmul.f32 %v336, 0.044715
        %v339 = vadd.f32 %v327, %v337
        %v340 = vadd.f32 %v329, %v338
        %v341 = vmul.f32 %v339, 0.7978846
        %v342 = vmul.f32 %v340, 0.7978846
        %v343 = vtanh.pop %v341
        %v344 = vtanh.pop %v342
        %v345 = vadd.f32 %v343, 1.0
        %v346 = vadd.f32 %v344, 1.0
        %v347 = vmul.f32 %v345, 0.5
        %v348 = vmul.f32 %v346, 0.5
        %v349 = vmul.f32 %v327, %v347
        %v350 = vmul.f32 %v329, %v348
        %v351 = vld [vmem:[%s3] sm:$0xf]
        %v352 = vpack.c.bf16 %v349, %v349
        %v353 = vpack.c.bf16 %v350, %v350
        %v354 = vld [vmem:[%s4] sm:$0xff]
        %356 = vset.pattern.permute.xlu0 0
        %357 = vperm.xlu0 %356, %v354
        %v358 = vpop.permute.xlu0 %357
        %v361 = vsel %vm281, %v351, 0
        %v364 = vsel %vm285, %v352, 0
        %v367 = vsel %vm285, %v353, 0
        %369 = vmatprep.subr.bf16.mxu0 0
        %370 = vmatpush1.bf16.msra.mxu0 0
        %371 = vmatprep.subr.bf16.mxu0 0
        %372 = vmatpush1.bf16.msra.mxu0 0
        %373 = vmatprep.subr.bf16.mxu0 0
        %374 = vmatpush1.bf16.msra.mxu0 0
        %375 = vmatprep.subr.bf16.mxu0 0
        %376 = vmatpush1.bf16.msra.mxu0 0
        %377 = vmatprep.subr.bf16.mxu0 0
        %378 = vmatpush1.bf16.msra.mxu0 0
        %379 = vmatprep.subr.bf16.mxu0 0
        %380 = vmatpush1.bf16.msra.mxu0 0
        %381 = vmatprep.subr.bf16.mxu0 0
        %382 = vmatpush1.bf16.msra.mxu0 0
        %383 = vmatprep.subr.bf16.mxu0 %v367
        %384 = vmatpush1.bf16.msra.mxu0 %v364
        %385 = vmatprep.subr.bf16.mxu0 0
        %386 = vmatpush2.bf16.msra.mxu0 0
        %387 = vmatprep.subr.bf16.mxu0 0
        %388 = vmatpush2.bf16.msra.mxu0 0
        %389 = vmatprep.subr.bf16.mxu0 0
        %390 = vmatpush2.bf16.msra.mxu0 0
        %391 = vmatprep.subr.bf16.mxu0 0
        %392 = vmatpush2.bf16.msra.mxu0 0
        %393 = vmatprep.subr.bf16.mxu0 0
        %394 = vmatpush2.bf16.msra.mxu0 0
        %395 = vmatprep.subr.bf16.mxu0 0
        %396 = vmatpush2.bf16.msra.mxu0 0
        %397 = vmatprep.subr.bf16.mxu0 0
        %398 = vmatpush2.bf16.msra.mxu0 0
        %399 = vmatprep.subr.bf16.mxu0 0
        %400 = vmatpush2.bf16.msra.mxu0 0
        %401 = vmatprep.mubr.bf16.mxu0 0
        %402 = vmatmul.mubr.bf16.gmra.mxu0 %v361
        %v403 = vpop.f32.mrf.mxu0
        %v404 = vadd.f32 %v358, %v403
        %v405 = vpop.f32.mrf.mxu0
        %v406 = vadd.f32 %v358, %v405
        %v407 = vpop.f32.mrf.mxu0
        %v408 = vpop.f32.mrf.mxu0
        %409 = vdwg.mxu0
        %v410 = vpack.c.bf16 %v404, %v404
        %v411 = vpack.c.bf16 %v406, %v406
        %v414 = vunpack.c.l.b16 %v410
        %v415 = vunpack.c.l.b16 %v411
        %v416 = vpack.c.b16 %v415, %v414
        %418 = vst [vmem:[%s255] sm:$0xff] %v416
        %s419 = sand.u32 %s154, 1
        %s420 = scalar_lea.sflag [#allocation4], %s419
        %s421 = sand.u32 %s154, 1
        %s422 = smul.addr %s421, 8
        %s423 = scalar_lea.vmem [#allocation5], %s422
        // Predicated region
        $region45: #{tpu_custom_call.1} parent=39 // pred_check
          %p424 = pneg %p164
        $region46: #{tpu_custom_call.1} parent=39 // pred_check_branch
          %426 = sbr.rel (%p424) target = $region48
        $region47: #{tpu_custom_call.1} parent=39 // pred_region
          %s427 = smul.u32 2, %s25
          %s429 = ssub.s32 128, 128
          %430 = vsyncadd %s420, %s429
          %s431 = smul.addr %s24, 2
          %s432 = sadd.s32 %s427, %s431
          %s433 = smul.addr %s432, 64
          %s434 = scalar_lea.hbm %s5, %s433
          %s436 = sshll.u32 %s423, 4
          %s437 = int_to_ptr.vmem [resolvable:$true] %s436
          %439 = dma.vmem_to_hbm [thread:$0]  %s437, 128, %s434, %s420
        $region48: #{tpu_custom_call.1} parent=39 // pred_fallthru
          _
      $region40: #{tpu_custom_call.1} parent=5 // pred_fallthru
        _
      %p440 = scmp.le.s32.totalorder 2, %s15
      // Predicated region
      $region49: #{tpu_custom_call.1} parent=5 // pred_check
        %p441 = pneg %p440
      $region50: #{tpu_custom_call.1} parent=5 // pred_check_branch
        %443 = sbr.rel (%p441) target = $region52
      $region51: #{tpu_custom_call.1} parent=5 // pred_region
        %s444 = ssub.s32 %s15, 2
        // Predicated region
        $region53: #{tpu_custom_call.1} parent=51 // pred_check
          %p445 = pneg %p170
        $region54: #{tpu_custom_call.1} parent=51 // pred_check_branch
          %447 = sbr.rel (%p445) target = $region56
        $region55: #{tpu_custom_call.1} parent=51 // pred_region
          %s448 = sand.u32 %s155, 1
          %s449 = scalar_lea.sflag [#allocation4], %s448
          %s450 = sand.u32 %s155, 1
          %s451 = smul.addr %s450, 8
          %s452 = scalar_lea.vmem [#allocation5], %s451
          %453 = dma.done %s449, 128
        $region56: #{tpu_custom_call.1} parent=51 // pred_fallthru
          _
      $region52: #{tpu_custom_call.1} parent=5 // pred_fallthru
        _
    $region6: #{tpu_custom_call.1} parent=1 // loop_footer
      %s19 = sadd.s32 1, %s15
    $region7: #{tpu_custom_call.1} parent=1 // loop_footer_branch
      %14 = sbr.rel target = $region3
    $region8: #{tpu_custom_call.1} parent=1 // loop_exit
      _
    %454 = vsyncpa [#allocation3], 1
    %s455 = scalar_lea.sflag [#allocation3], 1
    %456 = vsyncpa %s455, 1
    %457 = vsyncpa [#allocation4], 1
    %s458 = scalar_lea.sflag [#allocation4], 1
    %459 = vsyncpa %s458, 1

</llo_original>
